<compile_context>
chip_gen: v7x
topology: tpu7x:2x2x1
jax: 0.10.0
libtpu: 0.0.40
codegen_flags: <defaults>
</compile_context>

<pallas_src>
import functools

import jax
import jax.numpy as jnp
from jax.experimental import pallas as pl
from jax.experimental.pallas import tpu as pltpu


def _round_up(a: int, b: int) -> int:
    return (a + b - 1) // b * b


def _dice_kernel(x_ref, t_ref, o_ref, acc_pt, acc_p, acc_t, *,
                 squared: bool, valid_cols: int, tile: int):
    j = pl.program_id(1)
    last_j = pl.num_programs(1) - 1

    # Per-n accumulator reset (the N axis is fully parallel).
    @pl.when(j == 0)
    def _():
        acc_pt[...] = jnp.zeros_like(acc_pt)
        acc_p[...] = jnp.zeros_like(acc_p)
        acc_t[...] = jnp.zeros_like(acc_t)

    x = x_ref[0].astype(jnp.float32)          # (C, tile)
    t = t_ref[0].astype(jnp.float32)          # (1, tile)

    # Class-1 softmax probability without the explicit max pass:
    #   p1 = 1 / sum_i exp(x_i - x_1)
    # exp overflow -> +inf -> p1 = 0 (the correct limit), so no max is needed.
    z = jnp.sum(jnp.exp(x - x[1:2, :]), axis=0, keepdims=True)   # (1, tile)
    p1 = 1.0 / z                                                 # (1, tile)

    def accumulate(p1v, tv):
        acc_pt[...] += p1v * tv
        if squared:
            acc_p[...] += p1v * p1v
            acc_t[...] += tv * tv
        else:
            acc_p[...] += p1v
            acc_t[...] += tv

    if valid_cols % tile != 0:
        # Ragged tail: the last lane-tile reads past the array end; those
        # lanes are undefined (possibly NaN/Inf).  Select them away.
        @pl.when(j != last_j)
        def _():
            accumulate(p1, t)

        @pl.when(j == last_j)
        def _():
            col = j * tile + jax.lax.broadcasted_iota(jnp.int32, (1, tile), 1)
            valid = col < valid_cols
            accumulate(jnp.where(valid, p1, 0.0), jnp.where(valid, t, 0.0))
    else:
        accumulate(p1, t)

    # Per-batch partial sums -> (1, 8, 128) output block for this n:
    #   row 0 = sum(p1*t), row 1 = sum(p1 [or p1^2]), row 2 = sum(t [or t^2]).
    @pl.when(j == last_j)
    def _():
        num = jnp.sum(acc_pt[...])
        psum = jnp.sum(acc_p[...])
        tsum = jnp.sum(acc_t[...])
        row = jax.lax.broadcasted_iota(jnp.int32, (8, 128), 0)
        blk = jnp.where(row == 0, num,
              jnp.where(row == 1, psum,
              jnp.where(row == 2, tsum, 0.0)))
        o_ref[0] = blk


def dice_loss_raw(logits, target, *, squared: bool = False, eps: float = 1e-8,
                  tile: int = 32768):
    """logits: (N, C, H, W) float; target: (N, H, W) float. Returns scalar f32."""
    N, C, H, W = logits.shape
    assert C >= 2, "dice loss uses class index 1; need at least 2 channels"
    HW = H * W

    # Free, contiguous reshapes -- no transpose / pad / extra HBM pass.
    x = logits.reshape(N, C, HW)
    t = target.reshape(N, 1, HW)

    # Clamp the lane tile to the (128-rounded) spatial size.
    tile = int(min(tile, _round_up(HW, 128)))
    assert tile % 128 == 0, "tile must be a multiple of 128"
    grid = (N, pl.cdiv(HW, tile))

    # Scoped-VMEM budget: double-buffered input blocks (sublane-padded) +
    # three accumulators + headroom.  Explicit so v5e's 16 MiB default and
    # very large tiles never gate the pipeline.
    c_pad = _round_up(C, 8)
    vmem_bytes = (2 * (c_pad + 8) * tile * 4     # double-buffered x & t blocks
                  + 3 * 8 * tile * 4             # accumulators (sublane-padded)
                  + (4 << 20))                   # headroom
    vmem_bytes = max(vmem_bytes, 32 << 20)
    vmem_bytes = min(vmem_bytes, 60 << 20)       # stay under v7x physical VMEM

    kernel = functools.partial(_dice_kernel, squared=squared,
                               valid_cols=HW, tile=tile)

    partial = pl.pallas_call(
        kernel,
        out_shape=jax.ShapeDtypeStruct((N, 8, 128), jnp.float32),
        grid_spec=pltpu.PrefetchScalarGridSpec(
            num_scalar_prefetch=0,
            grid=grid,
            in_specs=[
                pl.BlockSpec((1, C, tile), lambda n, j: (n, 0, j)),
                pl.BlockSpec((1, 1, tile), lambda n, j: (n, 0, j)),
            ],
            out_specs=pl.BlockSpec((1, 8, 128), lambda n, j: (n, 0, 0)),
            scratch_shapes=[
                pltpu.VMEM((1, tile), jnp.float32),   # sum(p1 * target)
                pltpu.VMEM((1, tile), jnp.float32),   # sum(p1)  (or p1**2)
                pltpu.VMEM((1, tile), jnp.float32),   # sum(t)   (or t**2)
            ],
        ),
        compiler_params=pltpu.CompilerParams(
            # N axis is independent per batch element (megacore on v7x);
            # the lane-tile axis carries the accumulators -> serial.
            dimension_semantics=("parallel", "arbitrary"),
            vmem_limit_bytes=int(vmem_bytes),
        ),
    )(x, t)

    numerator = 2.0 * jnp.sum(partial[:, 0, 0])
    denominator = jnp.sum(partial[:, 1, 0]) + jnp.sum(partial[:, 2, 0])
    return 1.0 - (numerator + eps) / (denominator + eps)


def _dice_loss_ref(logits, target, squared=False, eps=1e-8):
    probs = jax.nn.softmax(logits.astype(jnp.float32), axis=1)
    p1 = probs[:, 1]
    t = target.astype(jnp.float32)
    numerator = 2.0 * jnp.sum(p1 * t)
    if squared:
        p1 = p1 ** 2
        t = t ** 2
    denominator = jnp.sum(p1) + jnp.sum(t)
    return 1.0 - (numerator + eps) / (denominator + eps)


if __name__ == "__main__":
    key = jax.random.PRNGKey(0)
    k1, k2, k3, k4, k5, k6 = jax.random.split(key, 6)

    # Case 1: standard shape (single lane-tile), squared=False and True.
    N, C, H, W = 2, 4, 16, 16
    logits = jax.random.normal(k1, (N, C, H, W), dtype=jnp.float32)
    target = (jax.random.uniform(k2, (N, H, W)) > 0.5).astype(jnp.float32)
    for sq in (False, True):
        loss = jax.block_until_ready(dice_loss_raw(logits, target, squared=sq))
        ref = _dice_loss_ref(logits, target, squared=sq)
        assert jnp.allclose(loss, ref, atol=1e-5), (sq, loss, ref)

    # Case 2: spatial size < 128 -> single ragged tile, exercises the mask.
    N2, C2, H2, W2 = 2, 3, 10, 10
    logits2 = jax.random.normal(k3, (N2, C2, H2, W2), dtype=jnp.float32)
    target2 = (jax.random.uniform(k4, (N2, H2, W2)) > 0.5).astype(jnp.float32)
    loss2 = jax.block_until_ready(dice_loss_raw(logits2, target2))
    ref2 = _dice_loss_ref(logits2, target2)
    assert jnp.allclose(loss2, ref2, atol=1e-5), (loss2, ref2)

    # Case 3: multi-tile grid with a ragged tail (explicit small tile).
    N3, C3, H3, W3 = 2, 4, 16, 18   # HW = 288, tile = 128 -> 3 tiles, tail 32
    logits3 = jax.random.normal(k5, (N3, C3, H3, W3), dtype=jnp.float32)
    target3 = (jax.random.uniform(k6, (N3, H3, W3)) > 0.5).astype(jnp.float32)
    loss3 = jax.block_until_ready(dice_loss_raw(logits3, target3, tile=128))
    ref3 = _dice_loss_ref(logits3, target3)
    assert jnp.allclose(loss3, ref3, atol=1e-5), (loss3, ref3)

    # Case 4: multi-tile grid, no tail (per-n reset/flush across j exercised).
    loss4 = jax.block_until_ready(dice_loss_raw(logits, target, tile=128))
    ref4 = _dice_loss_ref(logits, target)
    assert jnp.allclose(loss4, ref4, atol=1e-5), (loss4, ref4)

    print("KERNEL_OK")
</pallas_src>

<mosaic_0001>
module attributes {stable_mosaic.version = 11 : i64} {
  func.func @_dice_kernel(%arg0: i32, %arg1: i32, %arg2: memref<1x4x256xf32, #tpu.memory_space<vmem>>, %arg3: memref<1x1x256xf32, #tpu.memory_space<vmem>>, %arg4: memref<1x8x128xf32, #tpu.memory_space<vmem>>, %arg5: memref<1x256xf32, #tpu.memory_space<vmem>>, %arg6: memref<1x256xf32, #tpu.memory_space<vmem>>, %arg7: memref<1x256xf32, #tpu.memory_space<vmem>>) attributes {dimension_semantics = [#tpu.dimension_semantics<parallel>, #tpu.dimension_semantics<arbitrary>], iteration_bounds = array<i64: 2, 1>, scalar_prefetch = 0 : i64, scratch_operands = 3 : i64, tpu.core_type = #tpu.core_type<tc>, window_params = [{transform_indices = @transform_0, window_bounds = array<i64: 1, 4, 256>}, {transform_indices = @transform_1, window_bounds = array<i64: 1, 1, 256>}, {transform_indices = @transform_2, window_bounds = array<i64: 1, 8, 128>}]} {
    %c0_i32 = arith.constant 0 : i32
    %0 = arith.cmpi eq, %arg1, %c0_i32 : i32
    %1 = arith.extui %0 : i1 to i32
    %c0_i32_0 = arith.constant 0 : i32
    %2 = arith.cmpi ne, %1, %c0_i32_0 : i32
    scf.if %2 {
      %cst_21 = arith.constant 0.000000e+00 : f32
      %28 = vector.broadcast %cst_21 : f32 to vector<1x256xf32>
      %c0_22 = arith.constant 0 : index
      %c0_23 = arith.constant 0 : index
      %29 = vector.load %arg5[%c0_22, %c0_23] : memref<1x256xf32, #tpu.memory_space<vmem>>, vector<1x256xf32>
      tpu.vector_store %arg5[%c0_22, %c0_23], %28 {strides = array<i32>} : memref<1x256xf32, #tpu.memory_space<vmem>>, vector<1x256xf32>,
      %cst_24 = arith.constant 0.000000e+00 : f32
      %30 = vector.broadcast %cst_24 : f32 to vector<1x256xf32>
      %c0_25 = arith.constant 0 : index
      %c0_26 = arith.constant 0 : index
      %31 = vector.load %arg6[%c0_25, %c0_26] : memref<1x256xf32, #tpu.memory_space<vmem>>, vector<1x256xf32>
      tpu.vector_store %arg6[%c0_25, %c0_26], %30 {strides = array<i32>} : memref<1x256xf32, #tpu.memory_space<vmem>>, vector<1x256xf32>,
      %cst_27 = arith.constant 0.000000e+00 : f32
      %32 = vector.broadcast %cst_27 : f32 to vector<1x256xf32>
      %c0_28 = arith.constant 0 : index
      %c0_29 = arith.constant 0 : index
      %33 = vector.load %arg7[%c0_28, %c0_29] : memref<1x256xf32, #tpu.memory_space<vmem>>, vector<1x256xf32>
      tpu.vector_store %arg7[%c0_28, %c0_29], %32 {strides = array<i32>} : memref<1x256xf32, #tpu.memory_space<vmem>>, vector<1x256xf32>,
    } else {
    }
    %c0 = arith.constant 0 : index
    %c0_1 = arith.constant 0 : index
    %c0_2 = arith.constant 0 : index
    %3 = vector.load %arg2[%c0, %c0_1, %c0_2] : memref<1x4x256xf32, #tpu.memory_space<vmem>>, vector<1x4x256xf32>
    %4 = vector.shape_cast %3 : vector<1x4x256xf32> to vector<4x256xf32>
    %c0_3 = arith.constant 0 : index
    %c0_4 = arith.constant 0 : index
    %c0_5 = arith.constant 0 : index
    %5 = vector.load %arg3[%c0_3, %c0_4, %c0_5] : memref<1x1x256xf32, #tpu.memory_space<vmem>>, vector<1x1x256xf32>
    %6 = vector.shape_cast %5 : vector<1x1x256xf32> to vector<1x256xf32>
    %7 = vector.extract_strided_slice %4 {offsets = [1, 0], sizes = [1, 256], strides = [1, 1]} : vector<4x256xf32> to vector<1x256xf32>
    %8 = vector.broadcast %7 : vector<1x256xf32> to vector<4x256xf32>
    %9 = arith.subf %4, %8 : vector<4x256xf32>
    %10 = math.exp %9 : vector<4x256xf32>
    %cst = arith.constant dense<0.000000e+00> : vector<256xf32>
    %11 = vector.multi_reduction <add>, %10, %cst [0] : vector<4x256xf32> to vector<256xf32>
    %12 = vector.shape_cast %11 : vector<256xf32> to vector<1x256xf32>
    %cst_6 = arith.constant 1.000000e+00 : f32
    %13 = vector.broadcast %cst_6 : f32 to vector<1x256xf32>
    %14 = arith.divf %13, %12 : vector<1x256xf32>
    %c0_7 = arith.constant 0 : index
    %c0_8 = arith.constant 0 : index
    %15 = vector.load %arg5[%c0_7, %c0_8] : memref<1x256xf32, #tpu.memory_space<vmem>>, vector<1x256xf32>
    %16 = arith.mulf %14, %6 : vector<1x256xf32>
    %17 = arith.addf %15, %16 : vector<1x256xf32>
    %c0_9 = arith.constant 0 : index
    %c0_10 = arith.constant 0 : index
    %18 = vector.load %arg5[%c0_9, %c0_10] : memref<1x256xf32, #tpu.memory_space<vmem>>, vector<1x256xf32>
    tpu.vector_store %arg5[%c0_9, %c0_10], %17 {strides = array<i32>} : memref<1x256xf32, #tpu.memory_space<vmem>>, vector<1x256xf32>,
    %c0_11 = arith.constant 0 : index
    %c0_12 = arith.constant 0 : index
    %19 = vector.load %arg6[%c0_11, %c0_12] : memref<1x256xf32, #tpu.memory_space<vmem>>, vector<1x256xf32>
    %20 = arith.addf %19, %14 : vector<1x256xf32>
    %c0_13 = arith.constant 0 : index
    %c0_14 = arith.constant 0 : index
    %21 = vector.load %arg6[%c0_13, %c0_14] : memref<1x256xf32, #tpu.memory_space<vmem>>, vector<1x256xf32>
    tpu.vector_store %arg6[%c0_13, %c0_14], %20 {strides = array<i32>} : memref<1x256xf32, #tpu.memory_space<vmem>>, vector<1x256xf32>,
    %c0_15 = arith.constant 0 : index
    %c0_16 = arith.constant 0 : index
    %22 = vector.load %arg7[%c0_15, %c0_16] : memref<1x256xf32, #tpu.memory_space<vmem>>, vector<1x256xf32>
    %23 = arith.addf %22, %6 : vector<1x256xf32>
    %c0_17 = arith.constant 0 : index
    %c0_18 = arith.constant 0 : index
    %24 = vector.load %arg7[%c0_17, %c0_18] : memref<1x256xf32, #tpu.memory_space<vmem>>, vector<1x256xf32>
    tpu.vector_store %arg7[%c0_17, %c0_18], %23 {strides = array<i32>} : memref<1x256xf32, #tpu.memory_space<vmem>>, vector<1x256xf32>,
    %c0_i32_19 = arith.constant 0 : i32
    %25 = arith.cmpi eq, %arg1, %c0_i32_19 : i32
    %26 = arith.extui %25 : i1 to i32
    %c0_i32_20 = arith.constant 0 : i32
    %27 = arith.cmpi ne, %26, %c0_i32_20 : i32
    scf.if %27 {
      %c0_21 = arith.constant 0 : index
      %c0_22 = arith.constant 0 : index
      %28 = vector.load %arg5[%c0_21, %c0_22] : memref<1x256xf32, #tpu.memory_space<vmem>>, vector<1x256xf32>
      %29 = vector.shape_cast %28 : vector<1x256xf32> to vector<1x1x256xf32>
      %cst_23 = arith.constant dense<0.000000e+00> : vector<1xf32>
      %30 = vector.multi_reduction <add>, %29, %cst_23 [1, 2] : vector<1x1x256xf32> to vector<1xf32>
      %31 = vector.shape_cast %30 : vector<1xf32> to vector<1x1x1xf32>
      %32 = vector.extract %31[0, 0, 0] : f32 from vector<1x1x1xf32>
      %c0_24 = arith.constant 0 : index
      %c0_25 = arith.constant 0 : index
      %33 = vector.load %arg6[%c0_24, %c0_25] : memref<1x256xf32, #tpu.memory_space<vmem>>, vector<1x256xf32>
      %34 = vector.shape_cast %33 : vector<1x256xf32> to vector<1x1x256xf32>
      %cst_26 = arith.constant dense<0.000000e+00> : vector<1xf32>
      %35 = vector.multi_reduction <add>, %34, %cst_26 [1, 2] : vector<1x1x256xf32> to vector<1xf32>
      %36 = vector.shape_cast %35 : vector<1xf32> to vector<1x1x1xf32>
      %37 = vector.extract %36[0, 0, 0] : f32 from vector<1x1x1xf32>
      %c0_27 = arith.constant 0 : index
      %c0_28 = arith.constant 0 : index
      %38 = vector.load %arg7[%c0_27, %c0_28] : memref<1x256xf32, #tpu.memory_space<vmem>>, vector<1x256xf32>
      %39 = vector.shape_cast %38 : vector<1x256xf32> to vector<1x1x256xf32>
      %cst_29 = arith.constant dense<0.000000e+00> : vector<1xf32>
      %40 = vector.multi_reduction <add>, %39, %cst_29 [1, 2] : vector<1x1x256xf32> to vector<1xf32>
      %41 = vector.shape_cast %40 : vector<1xf32> to vector<1x1x1xf32>
      %42 = vector.extract %41[0, 0, 0] : f32 from vector<1x1x1xf32>
      %43 = tpu.iota {dimensions = array<i32: 0>} : vector<8x128xi32>
      %c0_i32_30 = arith.constant 0 : i32
      %44 = vector.broadcast %c0_i32_30 : i32 to vector<8x128xi32>
      %45 = arith.cmpi eq, %43, %44 : vector<8x128xi32>
      %c1_i32 = arith.constant 1 : i32
      %46 = vector.broadcast %c1_i32 : i32 to vector<8x128xi32>
      %47 = arith.cmpi eq, %43, %46 : vector<8x128xi32>
      %c2_i32 = arith.constant 2 : i32
      %48 = vector.broadcast %c2_i32 : i32 to vector<8x128xi32>
      %49 = arith.cmpi eq, %43, %48 : vector<8x128xi32>
      %cst_31 = arith.constant 0.000000e+00 : f32
      %50 = vector.broadcast %42 : f32 to vector<8x128xf32>
      %51 = vector.broadcast %cst_31 : f32 to vector<8x128xf32>
      %52 = arith.select %49, %50, %51 : vector<8x128xi1>, vector<8x128xf32>
      %53 = vector.broadcast %37 : f32 to vector<8x128xf32>
      %54 = arith.select %47, %53, %52 : vector<8x128xi1>, vector<8x128xf32>
      %55 = vector.broadcast %32 : f32 to vector<8x128xf32>
      %56 = arith.select %45, %55, %54 : vector<8x128xi1>, vector<8x128xf32>
      %c0_32 = arith.constant 0 : index
      %c0_33 = arith.constant 0 : index
      %c0_34 = arith.constant 0 : index
      %57 = vector.load %arg4[%c0_32, %c0_33, %c0_34] : memref<1x8x128xf32, #tpu.memory_space<vmem>>, vector<1x8x128xf32>
      %58 = vector.shape_cast %57 : vector<1x8x128xf32> to vector<8x128xf32>
      %59 = vector.shape_cast %56 : vector<8x128xf32> to vector<1x8x128xf32>
      tpu.vector_store %arg4[%c0_32, %c0_33, %c0_34], %59 {strides = array<i32>} : memref<1x8x128xf32, #tpu.memory_space<vmem>>, vector<1x8x128xf32>,
    } else {
    }
    return
  }
  func.func @transform_0(%arg0: i32, %arg1: i32) -> (i32, i32, i32) {
    %c0_i32 = arith.constant 0 : i32
    %c0_i32_0 = arith.constant 0 : i32
    return %arg0, %c0_i32, %arg1 : i32, i32, i32
  }
  func.func @transform_1(%arg0: i32, %arg1: i32) -> (i32, i32, i32) {
    %c0_i32 = arith.constant 0 : i32
    %c0_i32_0 = arith.constant 0 : i32
    return %arg0, %c0_i32, %arg1 : i32, i32, i32
  }
  func.func @transform_2(%arg0: i32, %arg1: i32) -> (i32, i32, i32) {
    %c0_i32 = arith.constant 0 : i32
    %c0_i32_0 = arith.constant 0 : i32
    %c0_i32_1 = arith.constant 0 : i32
    return %arg0, %c0_i32, %c0_i32_0 : i32, i32, i32
  }
}

</mosaic_0001>

<llo_original>
// kernel: tpu_custom_call.1
$region0: #{tpu_custom_call.1}
  #allocation0 [shape = 'u32[]', space=smem, size = 0x4, offset = 0x4, fixed_abs, tag = 'smem constant byte address 0x4 - core index']
  #allocation1 [shape = 'u32[144,128]{1,0:T(1,128)}', space=vmem, size = 0x12000, scoped, tag = 'internal scratch']
  #allocation2 [shape = 'f32[1,256]{1,0:T(1,128)}', space=vmem, size = 0x400, scoped, tag = 'scratch operand']
  #allocation3 [shape = 'f32[1,256]{1,0:T(1,128)}', space=vmem, size = 0x400, scoped, tag = 'scratch operand']
  #allocation4 [shape = 'f32[1,256]{1,0:T(1,128)}', space=vmem, size = 0x400, scoped, tag = 'scratch operand']
  %s0 = inlined_call_operand.hbm [shape: f32[2,4,256], index: 0, kind: input, shape index: {}]
  %s1 = inlined_call_operand.hbm [shape: f32[2,1,256], index: 1, kind: input, shape index: {}]
  %s2 = inlined_call_operand.hbm [shape: f32[2,8,128], index: 2, kind: output, shape index: {}]
  %s3 = sld [smem:[#allocation0]]
  $region57: #{tpu_custom_call.1} parent=0
    _
  %s5 = ssub.s32 1, %s3
  %s6 = scalar_select 0, %s5, %s3
  $region1: #{tpu_custom_call.1} parent=0
    #allocation5 [shape = 'u8[8192]{0}', space=vmem, size = 0x2000, scoped, tag = 'input window, operand 0']
    #allocation6 [shape = 's32[2]{0}', space=sflag, size = 0x8, scoped, tag = 'scoped memory for tpu_custom_call.1']
    #allocation7 [shape = 's32[2]{0}', space=sflag, size = 0x8, scoped, tag = 'scoped memory for tpu_custom_call.1']
    #allocation8 [shape = 'u8[2048]{0}', space=vmem, size = 0x800, scoped, tag = 'input window, operand 1']
    #allocation9 [shape = 's32[2]{0}', space=sflag, size = 0x8, scoped, tag = 'scoped memory for tpu_custom_call.1']
    #allocation10 [shape = 'u8[8192]{0}', space=vmem, size = 0x2000, scoped, tag = 'output window, operand 0']
    %7 = vsyncpa [#allocation6], 0
    %s8 = scalar_lea.sflag [#allocation6], 1
    %9 = vsyncpa %s8, 0
    %10 = vsyncpa [#allocation9], 0
    %s11 = scalar_lea.sflag [#allocation9], 1
    %12 = vsyncpa %s11, 0
    %13 = vsyncpa [#allocation7], 0
    %s14 = scalar_lea.sflag [#allocation7], 1
    %15 = vsyncpa %s14, 0
    loop: start=0, step=1, limit=4
    $region2: #{tpu_custom_call.1} parent=1 // loop_pre_header
      _
    $region3: #{tpu_custom_call.1} parent=1 // loop_header
      %s17 = sphi 0, %s21
      %p18 = scmp.ge.s32.totalorder %s17, 4
      %s24 = sphi 0, %s36
      %s25 = sphi 0, %s32
      %s26 = sphi 0, %s24
      %s27 = sphi 0, %s25
      %s28 = sphi 0, %s26
      %s29 = sphi 0, %s27
      %s41 = sphi 0, %s43
      %s44 = sphi 0, %s41
      %s45 = sphi 0, %s44
      %s61 = sphi 0, %s45
      %s69 = sphi 0, %s71
      %s72 = sphi 0, %s69
      %s73 = sphi 0, %s72
      %s89 = sphi 0, %s73
      %s95 = sphi 0, %s97
      %s98 = sphi 0, %s95
      %s99 = sphi 0, %s98
      %s115 = sphi 0, %s99
    $region4: #{tpu_custom_call.1} parent=1 // loop_header_branch
      %20 = sbr.rel (%p18) target = $region8
    $region5: #{tpu_custom_call.1} parent=1 // loop_body
      %s22 = ssub.s32 %s17, 1
      %s23 = ssub.s32 %s17, 2
      %s30 = sadd.s32 1, %s25
      %p31 = scmp.ge.s32.totalorder %s30, 1
      %s32 = scalar_select %p31, 0, %s30
      %s33 = sadd.s32 1, %s24
      %s34 = scalar_select %p31, %s33, %s24
      %p35 = scmp.ge.s32.totalorder %s34, 2
      %s36 = scalar_select %p35, 0, %s34
      %s37 = ssub.s32 %s24, %s36
      %s38 = ssub.s32 %s25, %s32
      %s39 = sor.u32 %s37, %s38
      %p40 = scmp.eq.s32.totalorder %s39, 0
      %s42 = sadd.s32 %s41, 1
      %s43 = scalar_select %p40, %s41, %s42
      %p46 = pneg %p40
      %p47 = scmp.eq.s32.totalorder %s17, 1
      %p48 = por %p46, %p47
      %p49 = scmp.ne.s32.totalorder %s41, %s44
      %p50 = scmp.eq.s32.totalorder %s17, 0
      %p51 = por %p49, %p50
      %p52 = scmp.ne.s32.totalorder %s41, %s44
      %p53 = scmp.eq.s32.totalorder %s22, 1
      %p54 = por %p52, %p53
      %p55 = scmp.ne.s32.totalorder %s44, %s45
      %p56 = scmp.eq.s32.totalorder %s22, 0
      %p57 = por %p55, %p56
      %p58 = scmp.ne.s32.totalorder %s44, %s45
      %p59 = scmp.eq.s32.totalorder %s23, 1
      %p60 = por %p58, %p59
      %p62 = scmp.ne.s32.totalorder %s45, %s61
      %p63 = scmp.eq.s32.totalorder %s23, 0
      %p64 = por %p62, %p63
      %s65 = ssub.s32 %s24, %s36
      %s66 = ssub.s32 %s25, %s32
      %s67 = sor.u32 %s65, %s66
      %p68 = scmp.eq.s32.totalorder %s67, 0
      %s70 = sadd.s32 %s69, 1
      %s71 = scalar_select %p68, %s69, %s70
      %p74 = pneg %p68
      %p75 = scmp.eq.s32.totalorder %s17, 1
      %p76 = por %p74, %p75
      %p77 = scmp.ne.s32.totalorder %s69, %s72
      %p78 = scmp.eq.s32.totalorder %s17, 0
      %p79 = por %p77, %p78
      %p80 = scmp.ne.s32.totalorder %s69, %s72
      %p81 = scmp.eq.s32.totalorder %s22, 1
      %p82 = por %p80, %p81
      %p83 = scmp.ne.s32.totalorder %s72, %s73
      %p84 = scmp.eq.s32.totalorder %s22, 0
      %p85 = por %p83, %p84
      %p86 = scmp.ne.s32.totalorder %s72, %s73
      %p87 = scmp.eq.s32.totalorder %s23, 1
      %p88 = por %p86, %p87
      %p90 = scmp.ne.s32.totalorder %s73, %s89
      %p91 = scmp.eq.s32.totalorder %s23, 0
      %p92 = por %p90, %p91
      %s93 = ssub.s32 %s24, %s36
      %p94 = scmp.eq.s32.totalorder %s93, 0
      %s96 = sadd.s32 %s95, 1
      %s97 = scalar_select %p94, %s95, %s96
      %p100 = pneg %p94
      %p101 = scmp.eq.s32.totalorder %s17, 1
      %p102 = por %p100, %p101
      %p103 = scmp.ne.s32.totalorder %s95, %s98
      %p104 = scmp.eq.s32.totalorder %s17, 0
      %p105 = por %p103, %p104
      %p106 = scmp.ne.s32.totalorder %s95, %s98
      %p107 = scmp.eq.s32.totalorder %s22, 1
      %p108 = por %p106, %p107
      %p109 = scmp.ne.s32.totalorder %s98, %s99
      %p110 = scmp.eq.s32.totalorder %s22, 0
      %p111 = por %p109, %p110
      %p112 = scmp.ne.s32.totalorder %s98, %s99
      %p113 = scmp.eq.s32.totalorder %s23, 1
      %p114 = por %p112, %p113
      %p116 = scmp.ne.s32.totalorder %s99, %s115
      %p117 = scmp.eq.s32.totalorder %s23, 0
      %p118 = por %p116, %p117
      %p119 = scmp.le.s32.totalorder 1, %s17
      %p120 = scmp.lt.s32.totalorder %s17, 3
      %p121 = pnand %p119, %p120
      %p122 = pneg %p121
      // Predicated region
      $region9: #{tpu_custom_call.1} parent=5 // pred_check
        _
      $region10: #{tpu_custom_call.1} parent=5 // pred_check_branch
        %124 = sbr.rel (%p121) target = $region12
      $region11: #{tpu_custom_call.1} parent=5 // pred_region
        %s125 = ssub.s32 %s17, 1
      $region12: #{tpu_custom_call.1} parent=5 // pred_fallthru
        _
      %p126 = scmp.lt.s32.totalorder %s17, 2
      // Predicated region
      $region13: #{tpu_custom_call.1} parent=5 // pred_check
        %p127 = pneg %p126
      $region14: #{tpu_custom_call.1} parent=5 // pred_check_branch
        %129 = sbr.rel (%p127) target = $region16
      $region15: #{tpu_custom_call.1} parent=5 // pred_region
        // Predicated region
        $region17: #{tpu_custom_call.1} parent=15 // pred_check
          %p130 = pneg %p51
        $region18: #{tpu_custom_call.1} parent=15 // pred_check_branch
          %132 = sbr.rel (%p130) target = $region20
        $region19: #{tpu_custom_call.1} parent=15 // pred_region
          %s133 = sand.u32 %s41, 1
          %s134 = scalar_lea.sflag [#allocation6], %s133
          %s135 = sand.u32 %s41, 1
          %s136 = smul.addr %s135, 8
          %s137 = scalar_lea.vmem [#allocation5], %s136
          %s138 = smul.u32 2, %s25
          %s140 = ssub.s32 128, 128
          %141 = vsyncadd %s134, %s140
          %s142 = smul.addr %s24, 2
          %s143 = sadd.s32 %s138, %s142
          %s144 = smul.addr %s143, 64
          %s145 = scalar_lea.hbm %s0, %s144
          %s147 = sshll.u32 %s137, 4
          %s148 = int_to_ptr.vmem [resolvable:$true] %s147
          %150 = dma.hbm_to_vmem [thread:$0]  %s145, 128, %s148, %s134
        $region20: #{tpu_custom_call.1} parent=15 // pred_fallthru
          _
        // Predicated region
        $region21: #{tpu_custom_call.1} parent=15 // pred_check
          %p151 = pneg %p79
        $region22: #{tpu_custom_call.1} parent=15 // pred_check_branch
          %153 = sbr.rel (%p151) target = $region24
        $region23: #{tpu_custom_call.1} parent=15 // pred_region
          %s154 = sand.u32 %s69, 1
          %s155 = scalar_lea.sflag [#allocation9], %s154
          %s156 = sand.u32 %s69, 1
          %s157 = smul.addr %s156, 2
          %s158 = scalar_lea.vmem [#allocation8], %s157
          %s159 = smul.u32 2, %s25
          %s161 = ssub.s32 32, 32
          %162 = vsyncadd %s155, %s161
          %s163 = smul.addr %s24, 2
          %s164 = sadd.s32 %s159, %s163
          %s165 = smul.addr %s164, 16
          %s166 = scalar_lea.hbm %s1, %s165
          %s168 = sshll.u32 %s158, 4
          %s169 = int_to_ptr.vmem [resolvable:$true] %s168
          %171 = dma.hbm_to_vmem [thread:$0]  %s166, 32, %s169, %s155
        $region24: #{tpu_custom_call.1} parent=15 // pred_fallthru
          _
      $region16: #{tpu_custom_call.1} parent=5 // pred_fallthru
        _
      %p172 = scmp.le.s32.totalorder 1, %s17
      %p173 = scmp.lt.s32.totalorder %s17, 3
      %p174 = pnand %p172, %p173
      %p175 = pneg %p174
      // Predicated region
      $region25: #{tpu_custom_call.1} parent=5 // pred_check
        _
      $region26: #{tpu_custom_call.1} parent=5 // pred_check_branch
        %177 = sbr.rel (%p174) target = $region28
      $region27: #{tpu_custom_call.1} parent=5 // pred_region
        %s178 = ssub.s32 %s17, 1
        %s179 = sand.u32 %s44, 1
        %s180 = scalar_lea.sflag [#allocation6], %s179
        %s181 = sand.u32 %s44, 1
        %s182 = smul.addr %s181, 8
        %s183 = scalar_lea.vmem [#allocation5], %s182
        // Predicated region
        $region29: #{tpu_custom_call.1} parent=27 // pred_check
          %p184 = pneg %p57
        $region30: #{tpu_custom_call.1} parent=27 // pred_check_branch
          %186 = sbr.rel (%p184) target = $region32
        $region31: #{tpu_custom_call.1} parent=27 // pred_region
          %187 = dma.done %s180, 128
        $region32: #{tpu_custom_call.1} parent=27 // pred_fallthru
          _
        %s188 = sand.u32 %s72, 1
        %s189 = scalar_lea.sflag [#allocation9], %s188
        %s190 = sand.u32 %s72, 1
        %s191 = smul.addr %s190, 2
        %s192 = scalar_lea.vmem [#allocation8], %s191
        // Predicated region
        $region33: #{tpu_custom_call.1} parent=27 // pred_check
          %p193 = pneg %p85
        $region34: #{tpu_custom_call.1} parent=27 // pred_check_branch
          %195 = sbr.rel (%p193) target = $region36
        $region35: #{tpu_custom_call.1} parent=27 // pred_region
          %196 = dma.done %s189, 32
        $region36: #{tpu_custom_call.1} parent=27 // pred_fallthru
          _
        %s197 = sand.u32 %s44, 1
        %s198 = scalar_lea.sflag [#allocation6], %s197
        %s199 = sand.u32 %s44, 1
        %s200 = smul.addr %s199, 8
        %s201 = scalar_lea.vmem [#allocation5], %s200
        %p202 = pneg %p57
        %p203 = pneg %p54
        %s204 = sand.u32 %s72, 1
        %s205 = scalar_lea.sflag [#allocation9], %s204
        %s206 = sand.u32 %s72, 1
        %s207 = smul.addr %s206, 2
        %s208 = scalar_lea.vmem [#allocation8], %s207
        %p209 = pneg %p85
        %p210 = pneg %p82
        %p211 = pneg %p111
        %p212 = pneg %p108
        %s213 = sand.u32 %s98, 1
        %s214 = scalar_lea.sflag [#allocation7], %s213
        %s215 = sand.u32 %s98, 1
        %s216 = smul.addr %s215, 8
        %s217 = scalar_lea.vmem [#allocation10], %s216
        %s218 = smul.u32 2, %s27
        %s219 = smul.u32 2, %s27
        %p220 = scmp.eq.s32.totalorder %s27, 0
        // Predicated region
        $region37: #{tpu_custom_call.1} parent=27 // pred_check
          %p221 = pneg %p220
        $region38: #{tpu_custom_call.1} parent=27 // pred_check_branch
          %223 = sbr.rel (%p221) target = $region40
        $region39: #{tpu_custom_call.1} parent=27 // pred_region
          %v224 = vlaneseq
          %vm225 = vcmp.ge.s32.totalorder %v224, 0
          %vm226 = vcmp.lt.s32.totalorder %v224, 256
          %vm227 = vmand %vm225, %vm226
          %228 = vst.msk [vmem:[#allocation2] sm:$0x3] %vm227, 0.0
          %229 = vst.msk [vmem:[#allocation3] sm:$0x3] %vm227, 0.0
          %230 = vst.msk [vmem:[#allocation4] sm:$0x3] %vm227, 0.0
        $region40: #{tpu_custom_call.1} parent=27 // pred_fallthru
          _
        %v231 = vld [vmem:[%s183] sm:$0xff]
        %v232 = vld [vmem:[%s192] sm:$0x3]
        %v234 = vlaneseq
        %v235 = vshrl.u32 %v234, 7
        %v236 = vsub.s32 1, %v235
        %v237 = vrot.slane %v231, %v236
        %v238 = vlaneseq
        %v239 = vshrl.u32 %v238, 7
        %v240 = vsub.s32 5, %v239
        %v241 = vrot.slane %v231, %v240
        %v244 = vlaneseq
        %v245 = vshrl.u32 %v244, 7
        %v246 = vsub.s32 1, %v245
        %v247 = vrot.slane %v237, %v246
        %v248 = vlaneseq
        %v249 = vshrl.u32 %v248, 7
        %v250 = vsub.s32 1, %v249
        %v251 = vrot.slane %v241, %v250
        %v254 = vcombine.low %v247, %v251
        %v256 = vsub.f32 %v231, %v254
        %v257 = vmul.f32 %v256, 1.442695
        %v258 = vpow.pop %v257
        %v260 = vcombine.high %v258, %v258
        %vm262 = vcmask 1043456
        %v263 = vsel %vm262, %v258, 0.0
        %v264 = vrot.slane %v263, 4
        %v265 = vadd.f32 %v263, %v264
        %v266 = vrot.slane %v265, 2
        %v267 = vadd.f32 %v265, %v266
        %v268 = vrot.slane %v267, 1
        %v269 = vadd.f32 %v267, %v268
        %v270 = vsel %vm262, %v260, 0.0
        %v271 = vrot.slane %v270, 4
        %v272 = vadd.f32 %v270, %v271
        %v273 = vrot.slane %v272, 2
        %v274 = vadd.f32 %v272, %v273
        %v275 = vrot.slane %v274, 1
        %v276 = vadd.f32 %v274, %v275
        %v277 = vrcp.pop %v269
        %v278 = vmul.f32 1.0, %v277
        %v279 = vrcp.pop %v276
        %v280 = vmul.f32 1.0, %v279
        %v281 = vld [vmem:[#allocation2] sm:$0x3]
        %v283 = vlaneseq
        %v284 = vshrl.u32 %v283, 7
        %v285 = vsub.s32 0, %v284
        %v286 = vrot.slane %v232, %v285
        %v287 = vlaneseq
        %v288 = vshrl.u32 %v287, 7
        %v289 = vsub.s32 1, %v288
        %v290 = vrot.slane %v232, %v289
        %v293 = vmul.f32 %v278, %v286
        %v294 = vmul.f32 %v280, %v290
        %v297 = vcombine.low %v293, %v294
        %v299 = vunpack.c.l.s4 1966171168
        %v300 = vunpack.c.0.s8 %v299
        %v301 = vlaneseq
        %v302 = vshrl.u32 %v301, 7
        %v303 = vsub.s32 %v300, %v302
        %v304 = vrot.slane %v297, %v303
        %v306 = vunpack.c.l.s4 1966171168
        %v307 = vunpack.c.0.s8 %v306
        %v308 = vlaneseq
        %v309 = vshrl.u32 %v308, 7
        %v310 = vsub.s32 %v307, %v309
        %v311 = vrot.slane %v304, %v310
        %v313 = vadd.f32 %v281, %v311
        %v314 = vlaneseq
        %vm315 = vcmp.ge.s32.totalorder %v314, 0
        %vm316 = vcmp.lt.s32.totalorder %v314, 256
        %vm317 = vmand %vm315, %vm316
        %318 = vst.msk [vmem:[#allocation2] sm:$0x3] %vm317, %v313
        %v319 = vld [vmem:[#allocation3] sm:$0x3]
        %v322 = vcombine.low %v278, %v280
        %v324 = vunpack.c.l.s4 1966171168
        %v325 = vunpack.c.0.s8 %v324
        %v326 = vlaneseq
        %v327 = vshrl.u32 %v326, 7
        %v328 = vsub.s32 %v325, %v327
        %v329 = vrot.slane %v322, %v328
        %v331 = vunpack.c.l.s4 1966171168
        %v332 = vunpack.c.0.s8 %v331
        %v333 = vlaneseq
        %v334 = vshrl.u32 %v333, 7
        %v335 = vsub.s32 %v332, %v334
        %v336 = vrot.slane %v329, %v335
        %v338 = vadd.f32 %v319, %v336
        %339 = vst.msk [vmem:[#allocation3] sm:$0x3] %vm317, %v338
        %v340 = vld [vmem:[#allocation4] sm:$0x3]
        %v341 = vadd.f32 %v340, %v232
        %342 = vst.msk [vmem:[#allocation4] sm:$0x3] %vm317, %v341
        // Predicated region
        $region41: #{tpu_custom_call.1} parent=27 // pred_check
          %p343 = pneg %p220
        $region42: #{tpu_custom_call.1} parent=27 // pred_check_branch
          %345 = sbr.rel (%p343) target = $region44
        $region43: #{tpu_custom_call.1} parent=27 // pred_region
          %v346 = vld [vmem:[#allocation2] sm:$0x3]
          %v348 = vlaneseq
          %v349 = vshrl.u32 %v348, 7
          %v350 = vsub.s32 0, %v349
          %v351 = vrot.slane %v346, %v350
          %v352 = vlaneseq
          %v353 = vshrl.u32 %v352, 7
          %v354 = vsub.s32 1, %v353
          %v355 = vrot.slane %v346, %v354
          %vm358 = vcmask 1040384
          %v359 = vsel %vm358, %v351, 0.0
          %v360 = vsel %vm358, %v355, 0.0
          %v361 = vadd.f32 %v359, %v360
          %362 = vadd.xlane.f32.xlu0 %v361
          %v363 = vpop.xlane.xlu0 %362
          %v364 = vrot.slane %v363, 4
          %v365 = vadd.f32 %v363, %v364
          %v366 = vrot.slane %v365, 2
          %v367 = vadd.f32 %v365, %v366
          %v368 = vrot.slane %v367, 1
          %v369 = vadd.f32 %v367, %v368
          %s370 = vtos %v369
          %v371 = vld [vmem:[#allocation3] sm:$0x3]
          %v373 = vlaneseq
          %v374 = vshrl.u32 %v373, 7
          %v375 = vsub.s32 0, %v374
          %v376 = vrot.slane %v371, %v375
          %v377 = vlaneseq
          %v378 = vshrl.u32 %v377, 7
          %v379 = vsub.s32 1, %v378
          %v380 = vrot.slane %v371, %v379
          %v383 = vsel %vm358, %v376, 0.0
          %v384 = vsel %vm358, %v380, 0.0
          %v385 = vadd.f32 %v383, %v384
          %386 = vadd.xlane.f32.xlu0 %v385
          %v387 = vpop.xlane.xlu0 %386
          %v388 = vrot.slane %v387, 4
          %v389 = vadd.f32 %v387, %v388
          %v390 = vrot.slane %v389, 2
          %v391 = vadd.f32 %v389, %v390
          %v392 = vrot.slane %v391, 1
          %v393 = vadd.f32 %v391, %v392
          %s394 = vtos %v393
          %v395 = vld [vmem:[#allocation4] sm:$0x3]
          %v397 = vlaneseq
          %v398 = vshrl.u32 %v397, 7
          %v399 = vsub.s32 0, %v398
          %v400 = vrot.slane %v395, %v399
          %v401 = vlaneseq
          %v402 = vshrl.u32 %v401, 7
          %v403 = vsub.s32 1, %v402
          %v404 = vrot.slane %v395, %v403
          %v407 = vsel %vm358, %v400, 0.0
          %v408 = vsel %vm358, %v404, 0.0
          %v409 = vadd.f32 %v407, %v408
          %410 = vadd.xlane.f32.xlu0 %v409
          %v411 = vpop.xlane.xlu0 %410
          %v412 = vrot.slane %v411, 4
          %v413 = vadd.f32 %v411, %v412
          %v414 = vrot.slane %v413, 2
          %v415 = vadd.f32 %v413, %v414
          %v416 = vrot.slane %v415, 1
          %v417 = vadd.f32 %v415, %v416
          %s418 = vtos %v417
          %v419 = vlaneseq
          %v420 = vshrl.u32 %v419, 7
          %vm421 = vcmp.eq.s32.totalorder %v420, 0
          %vm422 = vcmp.eq.s32.totalorder %v420, 1
          %vm423 = vcmp.eq.s32.totalorder %v420, 2
          %v424 = vstv %s418
          %v425 = vsel %vm423, %v424, 0.0
          %v426 = vstv %s394
          %v427 = vsel %vm422, %v426, %v425
          %v428 = vstv %s370
          %v429 = vsel %vm421, %v428, %v427
          %430 = vst [vmem:[%s217] sm:$0xff] %v429
        $region44: #{tpu_custom_call.1} parent=27 // pred_fallthru
          _
        %s431 = sand.u32 %s98, 1
        %s432 = scalar_lea.sflag [#allocation7], %s431
        %s433 = sand.u32 %s98, 1
        %s434 = smul.addr %s433, 8
        %s435 = scalar_lea.vmem [#allocation10], %s434
        // Predicated region
        $region45: #{tpu_custom_call.1} parent=27 // pred_check
          %p436 = pneg %p108
        $region46: #{tpu_custom_call.1} parent=27 // pred_check_branch
          %438 = sbr.rel (%p436) target = $region48
        $region47: #{tpu_custom_call.1} parent=27 // pred_region
          %s440 = ssub.s32 128, 128
          %441 = vsyncadd %s432, %s440
          %s442 = smul.addr %s26, 128
          %s443 = scalar_lea.hbm %s2, %s442
          %s445 = sshll.u32 %s435, 4
          %s446 = int_to_ptr.vmem [resolvable:$true] %s445
          %448 = dma.vmem_to_hbm [thread:$0]  %s446, 128, %s443, %s432
        $region48: #{tpu_custom_call.1} parent=27 // pred_fallthru
          _
      $region28: #{tpu_custom_call.1} parent=5 // pred_fallthru
        _
      %p449 = scmp.le.s32.totalorder 2, %s17
      // Predicated region
      $region49: #{tpu_custom_call.1} parent=5 // pred_check
        %p450 = pneg %p449
      $region50: #{tpu_custom_call.1} parent=5 // pred_check_branch
        %452 = sbr.rel (%p450) target = $region52
      $region51: #{tpu_custom_call.1} parent=5 // pred_region
        %s453 = ssub.s32 %s17, 2
        // Predicated region
        $region53: #{tpu_custom_call.1} parent=51 // pred_check
          %p454 = pneg %p114
        $region54: #{tpu_custom_call.1} parent=51 // pred_check_branch
          %456 = sbr.rel (%p454) target = $region56
        $region55: #{tpu_custom_call.1} parent=51 // pred_region
          %s457 = sand.u32 %s99, 1
          %s458 = scalar_lea.sflag [#allocation7], %s457
          %s459 = sand.u32 %s99, 1
          %s460 = smul.addr %s459, 8
          %s461 = scalar_lea.vmem [#allocation10], %s460
          %462 = dma.done %s458, 128
        $region56: #{tpu_custom_call.1} parent=51 // pred_fallthru
          _
      $region52: #{tpu_custom_call.1} parent=5 // pred_fallthru
        _
    $region6: #{tpu_custom_call.1} parent=1 // loop_footer
      %s21 = sadd.s32 1, %s17
    $region7: #{tpu_custom_call.1} parent=1 // loop_footer_branch
      %16 = sbr.rel target = $region3
    $region8: #{tpu_custom_call.1} parent=1 // loop_exit
      _
    %463 = vsyncpa [#allocation6], 1
    %s464 = scalar_lea.sflag [#allocation6], 1
    %465 = vsyncpa %s464, 1
    %466 = vsyncpa [#allocation9], 1
    %s467 = scalar_lea.sflag [#allocation9], 1
    %468 = vsyncpa %s467, 1
    %469 = vsyncpa [#allocation7], 1
    %s470 = scalar_lea.sflag [#allocation7], 1
    %471 = vsyncpa %s470, 1

</llo_original>
